<compile_context>
chip_gen: v5e
topology: v5e:2x2
jax: 0.10.0
libtpu: 0.0.40
codegen_flags: <defaults>
</compile_context>

<pallas_src>
import itertools
import numpy as np
import jax
import jax.numpy as jnp
from jax.experimental import pallas as pl
from jax.experimental.pallas import tpu as pltpu

NO_OBJECT = 14
NEG_FILL = -30000.0  # sigmoid(NEG_FILL) == 0 -> HW padding does not perturb row sums


def _round_up(x, m):
    return ((x + m - 1) // m) * m


# --------------------------- Pallas kernels ---------------------------------

def _cost_kernel(pred_ref, tgtT_ref, logit_ref, tsq_ref, c_ref, numer_acc, psq_acc):
    # pred_ref : [tm, tk]  mask logits (bf16)
    # tgtT_ref : [tk, Mp]  binary target masks, pre-transposed (bf16)
    # logit_ref: [tm, Mp]  class logits gathered at target label ids (f32, pre-sigmoid)
    # tsq_ref  : [1,  Mp]  per-target sum(t*t) (f32), precomputed outside
    k = pl.program_id(1)

    @pl.when(k == 0)
    def _init():
        numer_acc[...] = jnp.zeros_like(numer_acc)
        psq_acc[...] = jnp.zeros_like(psq_acc)

    p = jax.nn.sigmoid(pred_ref[...].astype(jnp.float32))
    # dice-score numerator: sigmoid(pred) @ tgt  (MXU, bf16 inputs, f32 accumulate)
    numer_acc[...] += jax.lax.dot_general(
        p.astype(jnp.bfloat16), tgtT_ref[...],
        (((1,), (0,)), ((), ())), preferred_element_type=jnp.float32)
    psq_acc[...] += jnp.sum(p * p, axis=-1, keepdims=True)

    @pl.when(k == pl.num_programs(1) - 1)
    def _finalize():
        denom = psq_acc[...] + tsq_ref[...] + 1e-4
        score = 2.0 * numer_acc[...] / denom
        prob = jax.nn.sigmoid(logit_ref[...])
        # C = score**0.8 * prob**0.2, fused: 2 logs + 1 exp on the EUP (vs 2 logs + 2 exps)
        c_ref[...] = jnp.exp(0.8 * jnp.log(score + 1e-30) + 0.2 * jnp.log(prob + 1e-30))


@jax.jit
def cost_matrix(pred_masks_flat, tgt_masks, gathered_logits):
    """Dice-score / class-prob cost matrix [BN, M], tiled over HW."""
    BN, HW = pred_masks_flat.shape
    M = tgt_masks.shape[0]

    tm = 128 if BN >= 128 else _round_up(BN, 8)
    BNp = _round_up(BN, tm)
    tk = min(_round_up(HW, 128), 512)
    HWp = _round_up(HW, tk)
    Mp = _round_up(M, 128)

    # HW padding uses a large negative fill so sigmoid(pad)==0 and |p|^2 is unchanged.
    pred = jnp.pad(pred_masks_flat.astype(jnp.bfloat16),
                   ((0, BNp - BN), (0, HWp - HW)), constant_values=NEG_FILL)
    tgt_t = jnp.pad(tgt_masks.T.astype(jnp.bfloat16),
                    ((0, HWp - HW), (0, Mp - M)))
    logits = jnp.pad(gathered_logits.astype(jnp.float32),
                     ((0, BNp - BN), (0, Mp - M)))
    tsq = jnp.pad(jnp.sum(tgt_masks * tgt_masks, axis=-1), (0, Mp - M)).reshape(1, Mp)

    c = pl.pallas_call(
        _cost_kernel,
        out_shape=jax.ShapeDtypeStruct((BNp, Mp), jnp.float32),
        grid=(BNp // tm, HWp // tk),
        in_specs=[
            pl.BlockSpec((tm, tk), lambda i, k: (i, k)),
            pl.BlockSpec((tk, Mp), lambda i, k: (k, 0)),
            pl.BlockSpec((tm, Mp), lambda i, k: (i, 0)),
            pl.BlockSpec((1, Mp), lambda i, k: (0, 0)),
        ],
        out_specs=pl.BlockSpec((tm, Mp), lambda i, k: (i, 0)),
        scratch_shapes=[pltpu.VMEM((tm, Mp), jnp.float32),
                        pltpu.VMEM((tm, 1), jnp.float32)],
        compiler_params=pltpu.CompilerParams(
            dimension_semantics=("parallel", "arbitrary"),
            vmem_limit_bytes=32 * 1024 * 1024),
    )(pred, tgt_t, logits, tsq)
    return c[:BN, :M]


def _focal_kernel(logit_ref, label_ref, out_ref):
    x = logit_ref[...]
    y = label_ref[...]
    p = jax.nn.sigmoid(x)
    # stable BCE-with-logits reusing the sigmoid: log1p(exp(-|x|)) == -log(p if x>=0 else 1-p)
    ce = jnp.maximum(x, 0.0) - x * y - jnp.log(jnp.where(x >= 0.0, p, 1.0 - p))
    p_t = p * y + (1.0 - p) * (1.0 - y)
    alpha_t = 0.25 * y + 0.75 * (1.0 - y)        # alpha = 0.25, gamma = 2
    out_ref[0, 0] = jnp.sum(alpha_t * ce * (1.0 - p_t) ** 2)


def focal_loss_sum(logits, labels):
    BN, C = logits.shape
    out = pl.pallas_call(
        _focal_kernel,
        out_shape=jax.ShapeDtypeStruct((1, 1), jnp.float32),
        grid=(1,),
        in_specs=[pl.BlockSpec((BN, C), lambda i: (0, 0)),
                  pl.BlockSpec((BN, C), lambda i: (0, 0))],
        out_specs=pl.BlockSpec(memory_space=pltpu.MemorySpace.SMEM),
        compiler_params=pltpu.CompilerParams(dimension_semantics=("arbitrary",)),
    )(logits, labels)
    return out[0, 0]


def _mask_kernel(src_ref, tgt_ref, score_ref, dice_ref, bce_ref, obj_ref):
    x = src_ref[...]          # [K, HW] mask logits of matched queries
    t = tgt_ref[...]          # [K, HW] matched binary target masks (0/1)
    p = jax.nn.sigmoid(x)

    sum_pt = jnp.sum(p * t, axis=-1, keepdims=True)
    sum_pp = jnp.sum(p * p, axis=-1, keepdims=True)
    sum_t = jnp.sum(t, axis=-1, keepdims=True)    # == sum(t*t), t is binary

    # dice loss, summed over matched instances
    dice = 1.0 - 2.0 * sum_pt / (sum_pp + sum_t + 1e-4)
    dice_ref[0, 0] = jnp.sum(dice)

    # mask IoU per row: (t > 0.5) == t for binary t, so only binarize p
    b = (p >= 0.4).astype(jnp.float32)
    inter = jnp.sum(b * t, axis=-1, keepdims=True)
    union = sum_t + jnp.sum(b, axis=-1, keepdims=True) - inter
    iou = inter / (union + 1e-6)

    # mask BCE-with-logits, summed over all K*HW elements (reuse sigmoid, no extra exp)
    ce = jnp.maximum(x, 0.0) - x * t - jnp.log(jnp.where(x >= 0.0, p, 1.0 - p))
    bce_ref[0, 0] = jnp.sum(ce)

    # objectness BCE-with-logits: score logits vs IoU targets, summed over rows
    s = score_ref[...]        # [K, 1]
    ps = jax.nn.sigmoid(s)
    obj = jnp.maximum(s, 0.0) - s * iou - jnp.log(jnp.where(s >= 0.0, ps, 1.0 - ps))
    obj_ref[0, 0] = jnp.sum(obj)


def mask_losses(src_masks, tgt_masks, src_scores):
    K, HW = src_masks.shape
    outs = pl.pallas_call(
        _mask_kernel,
        out_shape=tuple(jax.ShapeDtypeStruct((1, 1), jnp.float32) for _ in range(3)),
        grid=(1,),
        in_specs=[pl.BlockSpec((K, HW), lambda i: (0, 0)),
                  pl.BlockSpec((K, HW), lambda i: (0, 0)),
                  pl.BlockSpec((K, 1), lambda i: (0, 0))],
        out_specs=tuple(pl.BlockSpec(memory_space=pltpu.MemorySpace.SMEM)
                        for _ in range(3)),
        compiler_params=pltpu.CompilerParams(dimension_semantics=("arbitrary",)),
    )(src_masks, tgt_masks, src_scores)
    return outs[0][0, 0], outs[1][0, 0], outs[2][0, 0]


# ----------------- post-matching losses: one fused jit, one dispatch ----------

@jax.jit
def _post_match_loss(logits_flat, labels, pred_masks_flat, tgt_masks,
                     scores_flat, flat_src, mix_tgt, num_instances):
    focal_sum = focal_loss_sum(logits_flat, labels)

    src_masks = pred_masks_flat[flat_src]          # [K, HW]
    matched_tgt = tgt_masks[mix_tgt]               # [K, HW]
    src_scores = scores_flat[flat_src].reshape(-1, 1)
    dice_sum, bce_sum, obj_sum = mask_losses(src_masks, matched_tgt, src_scores)

    K, HW = src_masks.shape
    loss_labels = focal_sum / num_instances
    loss_dice = dice_sum / num_instances
    loss_mask = bce_sum / (K * HW)                 # BCE mean over all mask elements
    loss_objectness = obj_sum / K                  # BCE mean over matched instances
    loss_masks = 2.0 * loss_dice + 5.0 * loss_mask
    return 2.0 * loss_labels + 1.0 * loss_masks + 1.0 * loss_objectness


# --------------------------- Host-side glue ---------------------------------

def _linear_sum_assignment_max(cost):
    # TODO(synk): Hungarian matching is a host-side combinatorial algorithm (scipy's
    # linear_sum_assignment); exact brute-force optimum here for small N / #targets.
    n_rows, n_cols = cost.shape
    best_rows, best_val = None, -np.inf
    cols = np.arange(n_cols)
    for rows in itertools.permutations(range(n_rows), n_cols):
        val = cost[list(rows), cols].sum()
        if val > best_val:
            best_val, best_rows = val, rows
    row_ind = np.asarray(best_rows, dtype=np.int64)
    col_ind = np.arange(n_cols, dtype=np.int64)
    order = np.argsort(row_ind)
    return row_ind[order], col_ind[order]


def cal_loss(pred_masks, pred_logits, pred_scores, targets_np):
    B, N, HW = pred_masks.shape
    C = pred_logits.shape[-1]

    # ---- InstMatcher target prep (data-dependent torch.unique -> host glue) ----
    # TODO(synk): like the reference torch code, the all-background case (zero targets
    # across the whole batch) is not supported.
    tgt_ids, tgt_masks_np, sizes = [], [], []
    for b in range(B):
        cnt = 0
        for lbl in np.unique(targets_np[b]):          # sorted unique
            if lbl == NO_OBJECT:
                continue
            tgt_ids.append(int(lbl))
            tgt_masks_np.append((targets_np[b] == lbl).astype(np.float32))
            cnt += 1
        sizes.append(cnt)
    tgt_ids = np.asarray(tgt_ids, dtype=np.int32)
    tgt_masks = jnp.asarray(np.stack(tgt_masks_np))   # [M, HW]
    M = int(tgt_masks.shape[0])

    pred_masks_flat = pred_masks.reshape(B * N, HW).astype(jnp.float32)
    logits_flat = pred_logits.reshape(B * N, C).astype(jnp.float32)
    gathered_logits = logits_flat[:, jnp.asarray(tgt_ids)]

    # ---- cost matrix (Pallas: tiled dice-score + class-prob fusion) -> host ----
    Cmat = np.asarray(cost_matrix(pred_masks_flat, tgt_masks, gathered_logits))
    Cmat = Cmat.reshape(B, N, M)

    # ---- per-batch Hungarian matching (host) ----
    indices, off = [], 0
    for b, s in enumerate(sizes):
        indices.append(_linear_sum_assignment_max(Cmat[b][:, off:off + s]))
        off += s

    num_instances = float(max(sum(sizes), 1))         # clamp >=1 (guards div-by-zero)

    # ---- index bookkeeping (host, tiny) ----
    batch_idx = np.concatenate([np.full_like(src, i) for i, (src, _) in enumerate(indices)])
    src_idx = np.concatenate([src for src, _ in indices])
    tgt_col_idx = np.concatenate([tgt for _, tgt in indices])

    targets_labels = [np.unique(targets_np[b]) for b in range(B)]
    target_classes_o = np.concatenate(
        [targets_labels[i][J] for i, (_, J) in enumerate(indices)])
    target_classes = np.full((B, N), NO_OBJECT, dtype=np.int64)
    target_classes[batch_idx, src_idx] = target_classes_o
    target_classes = target_classes.reshape(B * N)

    labels = np.zeros((B * N, C), dtype=np.float32)
    pos = np.nonzero(target_classes != NO_OBJECT)[0]
    labels[pos, target_classes[pos]] = 1.0

    mix_tgt_idx = np.zeros_like(tgt_col_idx)
    cum = 0
    for s in sizes:
        mix_tgt_idx[cum:cum + s] = cum
        cum += s
    mix_tgt_idx = mix_tgt_idx + tgt_col_idx
    flat_src = (batch_idx * N + src_idx).astype(np.int32)

    # ---- everything after the matching: single fused jit (2 Pallas calls inside) ----
    return _post_match_loss(
        logits_flat, jnp.asarray(labels), pred_masks_flat, tgt_masks,
        pred_scores.reshape(B * N).astype(jnp.float32),
        jnp.asarray(flat_src), jnp.asarray(mix_tgt_idx.astype(np.int32)),
        jnp.float32(num_instances))


# --------------------------------- main --------------------------------------

if __name__ == "__main__":
    B, N, C = 2, 8, 15
    H = W = 16
    HW = H * W

    key = jax.random.PRNGKey(0)
    k1, k2, k3 = jax.random.split(key, 3)
    pred_masks = jax.random.normal(k1, (B, N, HW), jnp.float32)
    pred_logits = jax.random.normal(k2, (B, N, C), jnp.float32)
    pred_scores = jax.random.normal(k3, (B, N), jnp.float32)

    # deterministic synthetic label maps (label 14 = background, always present)
    targets = np.full((B, HW), NO_OBJECT, dtype=np.int32)
    targets[0, :60] = 2
    targets[0, 60:130] = 5
    targets[0, 130:200] = 9
    targets[1, :80] = 1
    targets[1, 80:180] = 7

    loss = cal_loss(pred_masks, pred_logits, pred_scores, targets)
    jax.block_until_ready(loss)
    print("KERNEL_OK")
</pallas_src>

<mosaic_0001>
module attributes {stable_mosaic.version = 11 : i64} {
  func.func @_cost_kernel(%arg0: i32, %arg1: i32, %arg2: memref<16x256xbf16, #tpu.memory_space<vmem>>, %arg3: memref<256x128xbf16, #tpu.memory_space<vmem>>, %arg4: memref<16x128xf32, #tpu.memory_space<vmem>>, %arg5: memref<1x128xf32, #tpu.memory_space<vmem>>, %arg6: memref<16x128xf32, #tpu.memory_space<vmem>>, %arg7: memref<16x128xf32, #tpu.memory_space<vmem>>, %arg8: memref<16x1xf32, #tpu.memory_space<vmem>>) attributes {dimension_semantics = [#tpu.dimension_semantics<parallel>, #tpu.dimension_semantics<arbitrary>], iteration_bounds = array<i64: 1, 1>, scalar_prefetch = 0 : i64, scratch_operands = 2 : i64, tpu.core_type = #tpu.core_type<tc>, window_params = [{transform_indices = @transform_0, window_bounds = array<i64: 16, 256>}, {transform_indices = @transform_1, window_bounds = array<i64: 256, 128>}, {transform_indices = @transform_2, window_bounds = array<i64: 16, 128>}, {pipeline_mode = #tpu.pipeline_mode<synchronous>, transform_indices = @transform_3, window_bounds = array<i64: 1, 128>}, {transform_indices = @transform_4, window_bounds = array<i64: 16, 128>}]} {
    %c0_i32 = arith.constant 0 : i32
    %0 = arith.cmpi eq, %arg1, %c0_i32 : i32
    %1 = arith.extui %0 : i1 to i32
    %c0_i32_0 = arith.constant 0 : i32
    %2 = arith.cmpi ne, %1, %c0_i32_0 : i32
    scf.if %2 {
      %cst_16 = arith.constant 0.000000e+00 : f32
      %25 = vector.broadcast %cst_16 : f32 to vector<16x128xf32>
      %c0_17 = arith.constant 0 : index
      %c0_18 = arith.constant 0 : index
      %26 = vector.load %arg7[%c0_17, %c0_18] : memref<16x128xf32, #tpu.memory_space<vmem>>, vector<16x128xf32>
      tpu.vector_store %arg7[%c0_17, %c0_18], %25 {strides = array<i32>} : memref<16x128xf32, #tpu.memory_space<vmem>>, vector<16x128xf32>,
      %cst_19 = arith.constant 0.000000e+00 : f32
      %27 = vector.broadcast %cst_19 : f32 to vector<16x1xf32>
      %c0_20 = arith.constant 0 : index
      %c0_21 = arith.constant 0 : index
      %28 = vector.load %arg8[%c0_20, %c0_21] : memref<16x1xf32, #tpu.memory_space<vmem>>, vector<16x1xf32>
      tpu.vector_store %arg8[%c0_20, %c0_21], %27 {strides = array<i32>} : memref<16x1xf32, #tpu.memory_space<vmem>>, vector<16x1xf32>,
    } else {
    }
    %c0 = arith.constant 0 : index
    %c0_1 = arith.constant 0 : index
    %3 = vector.load %arg2[%c0, %c0_1] : memref<16x256xbf16, #tpu.memory_space<vmem>>, vector<16x256xbf16>
    %4 = arith.extf %3 : vector<16x256xbf16> to vector<16x256xf32>
    %5 = arith.negf %4 : vector<16x256xf32>
    %6 = math.exp %5 : vector<16x256xf32>
    %cst = arith.constant 1.000000e+00 : f32
    %7 = vector.broadcast %cst : f32 to vector<16x256xf32>
    %8 = arith.addf %7, %6 : vector<16x256xf32>
    %9 = arith.divf %7, %8 : vector<16x256xf32>
    %c0_2 = arith.constant 0 : index
    %c0_3 = arith.constant 0 : index
    %10 = vector.load %arg7[%c0_2, %c0_3] : memref<16x128xf32, #tpu.memory_space<vmem>>, vector<16x128xf32>
    %11 = arith.truncf %9 : vector<16x256xf32> to vector<16x256xbf16>
    %c0_4 = arith.constant 0 : index
    %c0_5 = arith.constant 0 : index
    %12 = vector.load %arg3[%c0_4, %c0_5] : memref<256x128xbf16, #tpu.memory_space<vmem>>, vector<256x128xbf16>
    %cst_6 = arith.constant dense<0.000000e+00> : vector<16x128xf32>
    %13 = tpu.matmul %11, %12, %cst_6 {dimension_numbers = #tpu.dot_dimension_numbers<[1], [0], [0], [1], [0, 0, 1, 1], [], []>} : vector<16x256xbf16>, vector<256x128xbf16>, vector<16x128xf32> -> vector<16x128xf32>
    %14 = arith.addf %10, %13 : vector<16x128xf32>
    %c0_7 = arith.constant 0 : index
    %c0_8 = arith.constant 0 : index
    %15 = vector.load %arg7[%c0_7, %c0_8] : memref<16x128xf32, #tpu.memory_space<vmem>>, vector<16x128xf32>
    tpu.vector_store %arg7[%c0_7, %c0_8], %14 {strides = array<i32>} : memref<16x128xf32, #tpu.memory_space<vmem>>, vector<16x128xf32>,
    %c0_9 = arith.constant 0 : index
    %c0_10 = arith.constant 0 : index
    %16 = vector.load %arg8[%c0_9, %c0_10] : memref<16x1xf32, #tpu.memory_space<vmem>>, vector<16x1xf32>
    %17 = arith.mulf %9, %9 : vector<16x256xf32>
    %cst_11 = arith.constant dense<0.000000e+00> : vector<16xf32>
    %18 = vector.multi_reduction <add>, %17, %cst_11 [1] : vector<16x256xf32> to vector<16xf32>
    %19 = vector.shape_cast %18 : vector<16xf32> to vector<16x1xf32>
    %20 = arith.addf %16, %19 : vector<16x1xf32>
    %c0_12 = arith.constant 0 : index
    %c0_13 = arith.constant 0 : index
    %21 = vector.load %arg8[%c0_12, %c0_13] : memref<16x1xf32, #tpu.memory_space<vmem>>, vector<16x1xf32>
    tpu.vector_store %arg8[%c0_12, %c0_13], %20 {strides = array<i32>} : memref<16x1xf32, #tpu.memory_space<vmem>>, vector<16x1xf32>,
    %c0_i32_14 = arith.constant 0 : i32
    %22 = arith.cmpi eq, %arg1, %c0_i32_14 : i32
    %23 = arith.extui %22 : i1 to i32
    %c0_i32_15 = arith.constant 0 : i32
    %24 = arith.cmpi ne, %23, %c0_i32_15 : i32
    scf.if %24 {
      %c0_16 = arith.constant 0 : index
      %c0_17 = arith.constant 0 : index
      %25 = vector.load %arg8[%c0_16, %c0_17] : memref<16x1xf32, #tpu.memory_space<vmem>>, vector<16x1xf32>
      %c0_18 = arith.constant 0 : index
      %c0_19 = arith.constant 0 : index
      %26 = vector.load %arg5[%c0_18, %c0_19] : memref<1x128xf32, #tpu.memory_space<vmem>>, vector<1x128xf32>
      %27 = vector.broadcast %25 : vector<16x1xf32> to vector<16x128xf32>
      %28 = vector.broadcast %26 : vector<1x128xf32> to vector<16x128xf32>
      %29 = arith.addf %27, %28 : vector<16x128xf32>
      %cst_20 = arith.constant 9.99999974E-5 : f32
      %30 = vector.broadcast %cst_20 : f32 to vector<16x128xf32>
      %31 = arith.addf %29, %30 : vector<16x128xf32>
      %c0_21 = arith.constant 0 : index
      %c0_22 = arith.constant 0 : index
      %32 = vector.load %arg7[%c0_21, %c0_22] : memref<16x128xf32, #tpu.memory_space<vmem>>, vector<16x128xf32>
      %cst_23 = arith.constant 2.000000e+00 : f32
      %33 = vector.broadcast %cst_23 : f32 to vector<16x128xf32>
      %34 = arith.mulf %33, %32 : vector<16x128xf32>
      %35 = arith.divf %34, %31 : vector<16x128xf32>
      %c0_24 = arith.constant 0 : index
      %c0_25 = arith.constant 0 : index
      %36 = vector.load %arg4[%c0_24, %c0_25] : memref<16x128xf32, #tpu.memory_space<vmem>>, vector<16x128xf32>
      %37 = arith.negf %36 : vector<16x128xf32>
      %38 = math.exp %37 : vector<16x128xf32>
      %cst_26 = arith.constant 1.000000e+00 : f32
      %39 = vector.broadcast %cst_26 : f32 to vector<16x128xf32>
      %40 = arith.addf %39, %38 : vector<16x128xf32>
      %41 = arith.divf %39, %40 : vector<16x128xf32>
      %cst_27 = arith.constant 1.000000e-30 : f32
      %42 = vector.broadcast %cst_27 : f32 to vector<16x128xf32>
      %43 = arith.addf %35, %42 : vector<16x128xf32>
      %44 = math.log %43 : vector<16x128xf32>
      %cst_28 = arith.constant 8.000000e-01 : f32
      %45 = vector.broadcast %cst_28 : f32 to vector<16x128xf32>
      %46 = arith.mulf %45, %44 : vector<16x128xf32>
      %cst_29 = arith.constant 1.000000e-30 : f32
      %47 = vector.broadcast %cst_29 : f32 to vector<16x128xf32>
      %48 = arith.addf %41, %47 : vector<16x128xf32>
      %49 = math.log %48 : vector<16x128xf32>
      %cst_30 = arith.constant 2.000000e-01 : f32
      %50 = vector.broadcast %cst_30 : f32 to vector<16x128xf32>
      %51 = arith.mulf %50, %49 : vector<16x128xf32>
      %52 = arith.addf %46, %51 : vector<16x128xf32>
      %53 = math.exp %52 : vector<16x128xf32>
      %c0_31 = arith.constant 0 : index
      %c0_32 = arith.constant 0 : index
      %54 = vector.load %arg6[%c0_31, %c0_32] : memref<16x128xf32, #tpu.memory_space<vmem>>, vector<16x128xf32>
      tpu.vector_store %arg6[%c0_31, %c0_32], %53 {strides = array<i32>} : memref<16x128xf32, #tpu.memory_space<vmem>>, vector<16x128xf32>,
    } else {
    }
    return
  }
  func.func @transform_0(%arg0: i32, %arg1: i32) -> (i32, i32) {
    %c0_i32 = arith.constant 0 : i32
    return %arg0, %arg1 : i32, i32
  }
  func.func @transform_1(%arg0: i32, %arg1: i32) -> (i32, i32) {
    %c0_i32 = arith.constant 0 : i32
    %c0_i32_0 = arith.constant 0 : i32
    return %arg1, %c0_i32 : i32, i32
  }
  func.func @transform_2(%arg0: i32, %arg1: i32) -> (i32, i32) {
    %c0_i32 = arith.constant 0 : i32
    %c0_i32_0 = arith.constant 0 : i32
    return %arg0, %c0_i32 : i32, i32
  }
  func.func @transform_3(%arg0: i32, %arg1: i32) -> (i32, i32) {
    %c0_i32 = arith.constant 0 : i32
    %c0_i32_0 = arith.constant 0 : i32
    %c0_i32_1 = arith.constant 0 : i32
    return %c0_i32, %c0_i32_0 : i32, i32
  }
  func.func @transform_4(%arg0: i32, %arg1: i32) -> (i32, i32) {
    %c0_i32 = arith.constant 0 : i32
    %c0_i32_0 = arith.constant 0 : i32
    return %arg0, %c0_i32 : i32, i32
  }
}

</mosaic_0001>

<llo_original>
// kernel: cost_matrix.1
$region0: #{cost_matrix.1}
  #allocation0 [shape = 'u32[]', space=smem, size = 0x4, offset = 0x4, fixed_abs, tag = 'smem constant byte address 0x4 - core index']
  #allocation1 [shape = 'u32[72,128]{1,0:T(1,128)}', space=vmem, size = 0x9000, scoped, tag = 'internal scratch']
  #allocation2 [shape = 'f32[16,128]{1,0:T(8,128)}', space=vmem, size = 0x2000, scoped, tag = 'scratch operand']
  #allocation3 [shape = 'f32[16,1]{1,0:T(8,128)}', space=vmem, size = 0x2000, scoped, tag = 'scratch operand']
  %s0 = inlined_call_operand.vmem [shape: bf16[16,256], index: 0, kind: input, shape index: {}]
  %s1 = inlined_call_operand.vmem [shape: bf16[256,128], index: 1, kind: input, shape index: {}]
  %s2 = inlined_call_operand.vmem [shape: f32[16,128], index: 2, kind: input, shape index: {}]
  %s3 = inlined_call_operand.vmem [shape: f32[1,128], index: 3, kind: input, shape index: {}]
  %s4 = inlined_call_operand.vmem [shape: f32[16,128], index: 4, kind: output, shape index: {}]
  %s5 = sld [smem:[#allocation0]]
  $region34: #{cost_matrix.1} parent=0
    _
  %s7 = ssub.s32 1, %s5
  %s8 = scalar_select 0, %s7, %s5
  // Predicated region
  $region2: #{cost_matrix.1} parent=0 // pred_check
    _
  $region3: #{cost_matrix.1} parent=0 // pred_check_branch
    %10 = sbr.rel (0) target = $region5
  $region4: #{cost_matrix.1} parent=0 // pred_region
    _
  $region5: #{cost_matrix.1} parent=0 // pred_fallthru
    _
  // Predicated region
  $region6: #{cost_matrix.1} parent=0 // pred_check
    _
  $region7: #{cost_matrix.1} parent=0 // pred_check_branch
    %12 = sbr.rel (0) target = $region9
  $region8: #{cost_matrix.1} parent=0 // pred_region
    _
  $region9: #{cost_matrix.1} parent=0 // pred_fallthru
    _
  // Predicated region
  $region10: #{cost_matrix.1} parent=0 // pred_check
    _
  $region11: #{cost_matrix.1} parent=0 // pred_check_branch
    %14 = sbr.rel (0) target = $region13
  $region12: #{cost_matrix.1} parent=0 // pred_region
    _
  $region13: #{cost_matrix.1} parent=0 // pred_fallthru
    _
  // Predicated region
  $region14: #{cost_matrix.1} parent=0 // pred_check
    _
  $region15: #{cost_matrix.1} parent=0 // pred_check_branch
    %16 = sbr.rel (0) target = $region17
  $region16: #{cost_matrix.1} parent=0 // pred_region
    _
  $region17: #{cost_matrix.1} parent=0 // pred_fallthru
    _
  %p17 = scmp.eq.s32.totalorder 0, 0
  // Predicated region
  $region18: #{cost_matrix.1} parent=0 // pred_check
    %p18 = pneg %p17
  $region19: #{cost_matrix.1} parent=0 // pred_check_branch
    %20 = sbr.rel (%p18) target = $region21
  $region20: #{cost_matrix.1} parent=0 // pred_region
    %21 = vst [vmem:[#allocation2] sm:$0xff] 0.0
    %22 = vst [vmem:[#allocation2 + $0x8] sm:$0xff] 0.0
    %vm23 = vcmask 7168
    %24 = vst.msk [vmem:[#allocation3] sm:$0xff] %vm23, 0.0
    %25 = vst.msk [vmem:[#allocation3 + $0x8] sm:$0xff] %vm23, 0.0
  $region21: #{cost_matrix.1} parent=0 // pred_fallthru
    _
  %v26 = vld [vmem:[%s0] sm:$0xff]
  %v27 = vld [vmem:[%s0 + $0x8] sm:$0xff]
  %v28 = vunpack.c.l.bf16 %v26
  %v29 = vunpack.c.h.bf16 %v26
  %v30 = vunpack.c.l.bf16 %v27
  %v31 = vunpack.c.h.bf16 %v27
  %v32 = vxor.u32 %v28, 2147483648
  %v33 = vxor.u32 %v29, 2147483648
  %v34 = vxor.u32 %v30, 2147483648
  %v35 = vxor.u32 %v31, 2147483648
  %v36 = vmul.f32 %v32, 1.442695
  %v37 = vpow.pop %v36
  %v38 = vmul.f32 %v33, 1.442695
  %v39 = vpow.pop %v38
  %v40 = vmul.f32 %v34, 1.442695
  %v41 = vpow.pop %v40
  %v42 = vmul.f32 %v35, 1.442695
  %v43 = vpow.pop %v42
  %v44 = vadd.f32 %v37, 1.0
  %v45 = vadd.f32 %v39, 1.0
  %v46 = vadd.f32 %v41, 1.0
  %v47 = vadd.f32 %v43, 1.0
  %v48 = vrcp.pop %v44
  %v49 = vmul.f32 %v44, %v48
  %v50 = vsub.f32 1.0, %v49
  %v51 = vmul.f32 %v48, %v50
  %v52 = vadd.f32 %v48, %v51
  %vm53 = vweird.f32 %v44
  %vm54 = vweird.f32 %v48
  %vm55 = vmor %vm53, %vm54
  %v56 = vsel %vm55, %v48, %v52
  %v57 = vand.u32 2147483647, %v44
  %vm58 = vcmp.eq.f32.partialorder %v57, 8.507059e+37
  %v59 = vand.u32 %v44, 2147483648
  %v60 = vor.u32 1.1754944e-38, %v59
  %v61 = vsel %vm58, %v60, %v56
  %v62 = vmul.f32 1.0, %v61
  %v63 = vrcp.pop %v45
  %v64 = vmul.f32 %v45, %v63
  %v65 = vsub.f32 1.0, %v64
  %v66 = vmul.f32 %v63, %v65
  %v67 = vadd.f32 %v63, %v66
  %vm68 = vweird.f32 %v45
  %vm69 = vweird.f32 %v63
  %vm70 = vmor %vm68, %vm69
  %v71 = vsel %vm70, %v63, %v67
  %v72 = vand.u32 2147483647, %v45
  %vm73 = vcmp.eq.f32.partialorder %v72, 8.507059e+37
  %v74 = vand.u32 %v45, 2147483648
  %v75 = vor.u32 1.1754944e-38, %v74
  %v76 = vsel %vm73, %v75, %v71
  %v77 = vmul.f32 1.0, %v76
  %v78 = vrcp.pop %v46
  %v79 = vmul.f32 %v46, %v78
  %v80 = vsub.f32 1.0, %v79
  %v81 = vmul.f32 %v78, %v80
  %v82 = vadd.f32 %v78, %v81
  %vm83 = vweird.f32 %v46
  %vm84 = vweird.f32 %v78
  %vm85 = vmor %vm83, %vm84
  %v86 = vsel %vm85, %v78, %v82
  %v87 = vand.u32 2147483647, %v46
  %vm88 = vcmp.eq.f32.partialorder %v87, 8.507059e+37
  %v89 = vand.u32 %v46, 2147483648
  %v90 = vor.u32 1.1754944e-38, %v89
  %v91 = vsel %vm88, %v90, %v86
  %v92 = vmul.f32 1.0, %v91
  %v93 = vrcp.pop %v47
  %v94 = vmul.f32 %v47, %v93
  %v95 = vsub.f32 1.0, %v94
  %v96 = vmul.f32 %v93, %v95
  %v97 = vadd.f32 %v93, %v96
  %vm98 = vweird.f32 %v47
  %vm99 = vweird.f32 %v93
  %vm100 = vmor %vm98, %vm99
  %v101 = vsel %vm100, %v93, %v97
  %v102 = vand.u32 2147483647, %v47
  %vm103 = vcmp.eq.f32.partialorder %v102, 8.507059e+37
  %v104 = vand.u32 %v47, 2147483648
  %v105 = vor.u32 1.1754944e-38, %v104
  %v106 = vsel %vm103, %v105, %v101
  %v107 = vmul.f32 1.0, %v106
  %v108 = vld [vmem:[#allocation2] sm:$0xff]
  %v109 = vld [vmem:[#allocation2 + $0x8] sm:$0xff]
  %v110 = vpack.c.bf16 %v92, %v62
  %v111 = vpack.c.bf16 %v107, %v77
  %v112 = vld [vmem:[%s1] sm:$0xf]
  %v113 = vld [vmem:[%s1 + $0x4] sm:$0xf]
  %v114 = vld [vmem:[%s1 + $0x8] sm:$0xf]
  %v115 = vld [vmem:[%s1 + $0xc] sm:$0xf]
  %v116 = vld [vmem:[%s1 + $0x10] sm:$0xf]
  %v117 = vld [vmem:[%s1 + $0x14] sm:$0xf]
  %v118 = vld [vmem:[%s1 + $0x18] sm:$0xf]
  %v119 = vld [vmem:[%s1 + $0x1c] sm:$0xf]
  %v120 = vld [vmem:[%s1 + $0x20] sm:$0xf]
  %v121 = vld [vmem:[%s1 + $0x24] sm:$0xf]
  %v122 = vld [vmem:[%s1 + $0x28] sm:$0xf]
  %v123 = vld [vmem:[%s1 + $0x2c] sm:$0xf]
  %v124 = vld [vmem:[%s1 + $0x30] sm:$0xf]
  %v125 = vld [vmem:[%s1 + $0x34] sm:$0xf]
  %v126 = vld [vmem:[%s1 + $0x38] sm:$0xf]
  %v127 = vld [vmem:[%s1 + $0x3c] sm:$0xf]
  %v128 = vld [vmem:[%s1 + $0x40] sm:$0xf]
  %v129 = vld [vmem:[%s1 + $0x44] sm:$0xf]
  %v130 = vld [vmem:[%s1 + $0x48] sm:$0xf]
  %v131 = vld [vmem:[%s1 + $0x4c] sm:$0xf]
  %v132 = vld [vmem:[%s1 + $0x50] sm:$0xf]
  %v133 = vld [vmem:[%s1 + $0x54] sm:$0xf]
  %v134 = vld [vmem:[%s1 + $0x58] sm:$0xf]
  %v135 = vld [vmem:[%s1 + $0x5c] sm:$0xf]
  %v136 = vld [vmem:[%s1 + $0x60] sm:$0xf]
  %v137 = vld [vmem:[%s1 + $0x64] sm:$0xf]
  %v138 = vld [vmem:[%s1 + $0x68] sm:$0xf]
  %v139 = vld [vmem:[%s1 + $0x6c] sm:$0xf]
  %v140 = vld [vmem:[%s1 + $0x70] sm:$0xf]
  %v141 = vld [vmem:[%s1 + $0x74] sm:$0xf]
  %v142 = vld [vmem:[%s1 + $0x78] sm:$0xf]
  %v143 = vld [vmem:[%s1 + $0x7c] sm:$0xf]
  %v176 = vunpack.c.l.b16 %v112
  %v177 = vunpack.c.l.b16 %v113
  %v178 = vunpack.c.l.b16 %v114
  %v179 = vunpack.c.l.b16 %v115
  %v180 = vunpack.c.l.b16 %v116
  %v181 = vunpack.c.l.b16 %v117
  %v182 = vunpack.c.l.b16 %v118
  %v183 = vunpack.c.l.b16 %v119
  %v184 = vunpack.c.l.b16 %v120
  %v185 = vunpack.c.l.b16 %v121
  %v186 = vunpack.c.l.b16 %v122
  %v187 = vunpack.c.l.b16 %v123
  %v188 = vunpack.c.l.b16 %v124
  %v189 = vunpack.c.l.b16 %v125
  %v190 = vunpack.c.l.b16 %v126
  %v191 = vunpack.c.l.b16 %v127
  %v192 = vunpack.c.l.b16 %v128
  %v193 = vunpack.c.l.b16 %v129
  %v194 = vunpack.c.l.b16 %v130
  %v195 = vunpack.c.l.b16 %v131
  %v196 = vunpack.c.l.b16 %v132
  %v197 = vunpack.c.l.b16 %v133
  %v198 = vunpack.c.l.b16 %v134
  %v199 = vunpack.c.l.b16 %v135
  %v200 = vunpack.c.l.b16 %v136
  %v201 = vunpack.c.l.b16 %v137
  %v202 = vunpack.c.l.b16 %v138
  %v203 = vunpack.c.l.b16 %v139
  %v204 = vunpack.c.l.b16 %v140
  %v205 = vunpack.c.l.b16 %v141
  %v206 = vunpack.c.l.b16 %v142
  %v207 = vunpack.c.l.b16 %v143
  %v208 = vpack.c.b16 %v177, %v176
  %v209 = vpack.c.b16 %v179, %v178
  %v210 = vpack.c.b16 %v181, %v180
  %v211 = vpack.c.b16 %v183, %v182
  %v212 = vpack.c.b16 %v185, %v184
  %v213 = vpack.c.b16 %v187, %v186
  %v214 = vpack.c.b16 %v189, %v188
  %v215 = vpack.c.b16 %v191, %v190
  %v216 = vpack.c.b16 %v193, %v192
  %v217 = vpack.c.b16 %v195, %v194
  %v218 = vpack.c.b16 %v197, %v196
  %v219 = vpack.c.b16 %v199, %v198
  %v220 = vpack.c.b16 %v201, %v200
  %v221 = vpack.c.b16 %v203, %v202
  %v222 = vpack.c.b16 %v205, %v204
  %v223 = vpack.c.b16 %v207, %v206
  %240 = vmatpush.bf16.msra.mxu0 %v215
  %241 = vmatpush.bf16.msra.mxu0 %v214
  %242 = vmatpush.bf16.msra.mxu0 %v213
  %243 = vmatpush.bf16.msra.mxu0 %v212
  %244 = vmatpush.bf16.msra.mxu0 %v211
  %245 = vmatpush.bf16.msra.mxu0 %v210
  %246 = vmatpush.bf16.msra.mxu0 %v209
  %247 = vmatpush.bf16.msra.mxu0 %v208
  %248 = vmatmul.bf16.gmra.mxu0 %v110
  %v249 = vpop.f32.mrf.mxu0
  %v250 = vadd.f32 0.0, %v249
  %v251 = vpop.f32.mrf.mxu0
  %v252 = vadd.f32 0.0, %v251
  %253 = vdwg.mxu0
  %254 = vmatpush.bf16.msra.mxu0 %v223
  %255 = vmatpush.bf16.msra.mxu0 %v222
  %256 = vmatpush.bf16.msra.mxu0 %v221
  %257 = vmatpush.bf16.msra.mxu0 %v220
  %258 = vmatpush.bf16.msra.mxu0 %v219
  %259 = vmatpush.bf16.msra.mxu0 %v218
  %260 = vmatpush.bf16.msra.mxu0 %v217
  %261 = vmatpush.bf16.msra.mxu0 %v216
  %262 = vmatmul.bf16.gmra.mxu0 %v111
  %v263 = vpop.f32.mrf.mxu0
  %v264 = vadd.f32 %v250, %v263
  %v265 = vpop.f32.mrf.mxu0
  %v266 = vadd.f32 %v252, %v265
  %267 = vdwg.mxu0
  %v268 = vadd.f32 %v108, %v264
  %v269 = vadd.f32 %v109, %v266
  %270 = vst [vmem:[#allocation2] sm:$0xff] %v268
  %271 = vst [vmem:[#allocation2 + $0x8] sm:$0xff] %v269
  %v272 = vld [vmem:[#allocation3] sm:$0xff]
  %v273 = vld [vmem:[#allocation3 + $0x8] sm:$0xff]
  %v274 = vmul.f32 %v62, %v62
  %v275 = vmul.f32 %v77, %v77
  %v276 = vmul.f32 %v92, %v92
  %v277 = vmul.f32 %v107, %v107
  %v278 = vadd.f32 %v274, %v275
  %279 = vadd.xlane.f32.xlu0 %v278
  %v280 = vpop.xlane.xlu0 %279
  %v281 = vadd.f32 %v276, %v277
  %282 = vadd.xlane.f32.xlu0 %v281
  %v283 = vpop.xlane.xlu0 %282
  %v284 = vadd.f32 %v272, %v280
  %v285 = vadd.f32 %v273, %v283
  %vm286 = vcmask 7168
  %287 = vst.msk [vmem:[#allocation3] sm:$0xff] %vm286, %v284
  %288 = vst.msk [vmem:[#allocation3 + $0x8] sm:$0xff] %vm286, %v285
  // Predicated region
  $region22: #{cost_matrix.1} parent=0 // pred_check
    %p289 = pneg %p17
  $region23: #{cost_matrix.1} parent=0 // pred_check_branch
    %291 = sbr.rel (%p289) target = $region25
  $region24: #{cost_matrix.1} parent=0 // pred_region
    %v292 = vld [vmem:[#allocation3] sm:$0xff]
    %v293 = vld [vmem:[#allocation3 + $0x8] sm:$0xff]
    %v294 = vld [vmem:[%s3] sm:$0x1]
    %296 = vset.pattern.permute.xlu0 0
    %297 = vperm.xlu0 %296, %v292
    %v298 = vpop.permute.xlu0 %297
    %301 = vset.pattern.permute.xlu0 0
    %302 = vperm.xlu0 %301, %v293
    %v303 = vpop.permute.xlu0 %302
    %v306 = vperm.slane %v294, 0
    %v308 = vadd.f32 %v298, %v306
    %v309 = vadd.f32 %v303, %v306
    %v310 = vadd.f32 %v308, 0.0001
    %v311 = vadd.f32 %v309, 0.0001
    %v312 = vld [vmem:[#allocation2] sm:$0xff]
    %v313 = vld [vmem:[#allocation2 + $0x8] sm:$0xff]
    %v314 = vmul.f32 %v312, 2.0
    %v315 = vmul.f32 %v313, 2.0
    %v316 = vrcp.pop %v310
    %v317 = vmul.f32 %v310, %v316
    %v318 = vsub.f32 1.0, %v317
    %v319 = vmul.f32 %v316, %v318
    %v320 = vadd.f32 %v316, %v319
    %vm321 = vweird.f32 %v310
    %vm322 = vweird.f32 %v316
    %vm323 = vmor %vm321, %vm322
    %v324 = vsel %vm323, %v316, %v320
    %v325 = vand.u32 2147483647, %v310
    %vm326 = vcmp.eq.f32.partialorder %v325, 8.507059e+37
    %v327 = vand.u32 %v310, 2147483648
    %v328 = vor.u32 1.1754944e-38, %v327
    %v329 = vsel %vm326, %v328, %v324
    %v330 = vmul.f32 %v314, %v329
    %v331 = vrcp.pop %v311
    %v332 = vmul.f32 %v311, %v331
    %v333 = vsub.f32 1.0, %v332
    %v334 = vmul.f32 %v331, %v333
    %v335 = vadd.f32 %v331, %v334
    %vm336 = vweird.f32 %v311
    %vm337 = vweird.f32 %v331
    %vm338 = vmor %vm336, %vm337
    %v339 = vsel %vm338, %v331, %v335
    %v340 = vand.u32 2147483647, %v311
    %vm341 = vcmp.eq.f32.partialorder %v340, 8.507059e+37
    %v342 = vand.u32 %v311, 2147483648
    %v343 = vor.u32 1.1754944e-38, %v342
    %v344 = vsel %vm341, %v343, %v339
    %v345 = vmul.f32 %v315, %v344
    %v346 = vld [vmem:[%s2] sm:$0xff]
    %v347 = vld [vmem:[%s2 + $0x8] sm:$0xff]
    %v348 = vxor.u32 %v346, 2147483648
    %v349 = vxor.u32 %v347, 2147483648
    %v350 = vmul.f32 %v348, 1.442695
    %v351 = vpow.pop %v350
    %v352 = vmul.f32 %v349, 1.442695
    %v353 = vpow.pop %v352
    %v354 = vadd.f32 %v351, 1.0
    %v355 = vadd.f32 %v353, 1.0
    %v356 = vrcp.pop %v354
    %v357 = vmul.f32 %v354, %v356
    %v358 = vsub.f32 1.0, %v357
    %v359 = vmul.f32 %v356, %v358
    %v360 = vadd.f32 %v356, %v359
    %vm361 = vweird.f32 %v354
    %vm362 = vweird.f32 %v356
    %vm363 = vmor %vm361, %vm362
    %v364 = vsel %vm363, %v356, %v360
    %v365 = vand.u32 2147483647, %v354
    %vm366 = vcmp.eq.f32.partialorder %v365, 8.507059e+37
    %v367 = vand.u32 %v354, 2147483648
    %v368 = vor.u32 1.1754944e-38, %v367
    %v369 = vsel %vm366, %v368, %v364
    %v370 = vmul.f32 1.0, %v369
    %v371 = vrcp.pop %v355
    %v372 = vmul.f32 %v355, %v371
    %v373 = vsub.f32 1.0, %v372
    %v374 = vmul.f32 %v371, %v373
    %v375 = vadd.f32 %v371, %v374
    %vm376 = vweird.f32 %v355
    %vm377 = vweird.f32 %v371
    %vm378 = vmor %vm376, %vm377
    %v379 = vsel %vm378, %v371, %v375
    %v380 = vand.u32 2147483647, %v355
    %vm381 = vcmp.eq.f32.partialorder %v380, 8.507059e+37
    %v382 = vand.u32 %v355, 2147483648
    %v383 = vor.u32 1.1754944e-38, %v382
    %v384 = vsel %vm381, %v383, %v379
    %v385 = vmul.f32 1.0, %v384
    %v386 = vadd.f32 %v330, 1e-30
    %v387 = vadd.f32 %v345, 1e-30
    %v388 = vlog2.pop %v386
    %v389 = vmul.f32 %v388, 0.6931472
    %v390 = vlog2.pop %v387
    %v391 = vmul.f32 %v390, 0.6931472
    %v392 = vmul.f32 %v389, 0.8
    %v393 = vmul.f32 %v391, 0.8
    %v394 = vadd.f32 %v370, 1e-30
    %v395 = vadd.f32 %v385, 1e-30
    %v396 = vlog2.pop %v394
    %v397 = vmul.f32 %v396, 0.6931472
    %v398 = vlog2.pop %v395
    %v399 = vmul.f32 %v398, 0.6931472
    %v400 = vmul.f32 %v397, 0.2
    %v401 = vmul.f32 %v399, 0.2
    %v402 = vadd.f32 %v392, %v400
    %v403 = vadd.f32 %v393, %v401
    %v404 = vmul.f32 %v402, 1.442695
    %v405 = vpow.pop %v404
    %v406 = vmul.f32 %v403, 1.442695
    %v407 = vpow.pop %v406
    %408 = vst [vmem:[%s4] sm:$0xff] %v405
    %409 = vst [vmem:[%s4 + $0x8] sm:$0xff] %v407
  $region25: #{cost_matrix.1} parent=0 // pred_fallthru
    _
  // Predicated region
  $region26: #{cost_matrix.1} parent=0 // pred_check
    _
  $region27: #{cost_matrix.1} parent=0 // pred_check_branch
    %411 = sbr.rel (0) target = $region29
  $region28: #{cost_matrix.1} parent=0 // pred_region
    _
  $region29: #{cost_matrix.1} parent=0 // pred_fallthru
    _
  // Predicated region
  $region30: #{cost_matrix.1} parent=0 // pred_check
    _
  $region31: #{cost_matrix.1} parent=0 // pred_check_branch
    %413 = sbr.rel (0) target = $region33
  $region32: #{cost_matrix.1} parent=0 // pred_region
    _
  $region33: #{cost_matrix.1} parent=0 // pred_fallthru
    _

</llo_original>
